<compile_context>
chip_gen: v5e
topology: v5e:2x2
jax: 0.10.0
libtpu: 0.0.40
codegen_flags: <defaults>
</compile_context>

<pallas_src>
import functools
import math

import jax
import jax.numpy as jnp
from jax import lax
from jax.experimental import pallas as pl
from jax.experimental.pallas import tpu as pltpu  # noqa: F401  (TPU backend)

# ----------------------------- hyper-parameters ------------------------------
BATCH = 2
HEADS = 4
SEQ = 8
DIM = 32
# F.normalize clamps the L2 norm at 1e-12; clamping the sum of squares at
# (1e-12)^2 before rsqrt is equivalent (up to f32 rounding).
NORM_EPS_SQ = 1e-24


# --------------------------------- kernel ------------------------------------
def rmsnorm_kernel(x_ref, g_ref, o_ref, *, scale):
    # x_ref: (B, H, S, D);  g_ref: (H, 1, D) raw gamma;  scale = sqrt(D).
    x = x_ref[...].astype(jnp.float32)                       # f32 accumulation
    g = g_ref[...].astype(jnp.float32)
    ssq = jnp.sum(x * x, axis=-1, keepdims=True)              # (B, H, S, 1)
    # 1/max(||x||, eps) * sqrt(D): single EUP rsqrt + scalar multiply.
    inv_norm = lax.rsqrt(jnp.maximum(ssq, NORM_EPS_SQ)) * jnp.float32(scale)
    # gamma (H,1,D) broadcasts over batch and seq exactly as in torch.
    o_ref[...] = (x * inv_norm * g).astype(o_ref.dtype)


# --------------------------------- wrapper ------------------------------------
@jax.jit
def rmsnorm(x, gamma):
    B, H, S, D = x.shape
    kernel = functools.partial(rmsnorm_kernel, scale=math.sqrt(D))
    return pl.pallas_call(
        kernel,
        out_shape=jax.ShapeDtypeStruct((B, H, S, D), x.dtype),
        # No grid: the whole problem is one block, one kernel invocation.
        in_specs=[
            pl.BlockSpec((B, H, S, D), lambda: (0, 0, 0, 0)),  # x
            pl.BlockSpec((H, 1, D), lambda: (0, 0, 0)),        # gamma (raw)
        ],
        out_specs=pl.BlockSpec((B, H, S, D), lambda: (0, 0, 0, 0)),
    )(x, gamma)


# ----------------------------------- main -------------------------------------
if __name__ == "__main__":
    key = jax.random.PRNGKey(0)
    x = jax.random.normal(key, (BATCH, HEADS, SEQ, DIM), jnp.float32)

    # torch init: gamma = ones(heads, 1, dim) / dim**0.5
    gamma = jnp.full((HEADS, 1, DIM), 1.0 / math.sqrt(DIM), jnp.float32)

    out = rmsnorm(x, gamma)
    out = jax.block_until_ready(out)

    # Pure-JAX reference mirroring the torch module exactly.
    nrm = jnp.sqrt(jnp.sum(x * x, axis=-1, keepdims=True))
    ref = (x / jnp.maximum(nrm, 1e-12)) * jnp.float32(math.sqrt(DIM)) * gamma

    assert out.shape == (BATCH, HEADS, SEQ, DIM)
    assert bool(jnp.all(jnp.isfinite(out)))
    assert bool(jnp.allclose(out, ref, rtol=2e-5, atol=2e-6))
    print("KERNEL_OK")
</pallas_src>

<mosaic_0001>
module attributes {stable_mosaic.version = 11 : i64} {
  func.func @rmsnorm_kernel(%arg0: memref<2x4x8x32xf32, #tpu.memory_space<vmem>>, %arg1: memref<4x1x32xf32, #tpu.memory_space<vmem>>, %arg2: memref<2x4x8x32xf32, #tpu.memory_space<vmem>>) attributes {dimension_semantics = [], scalar_prefetch = 0 : i64, scratch_operands = 0 : i64, tpu.core_type = #tpu.core_type<tc>} {
    %c0 = arith.constant 0 : index
    %c0_0 = arith.constant 0 : index
    %c0_1 = arith.constant 0 : index
    %c0_2 = arith.constant 0 : index
    %0 = vector.load %arg0[%c0, %c0_0, %c0_1, %c0_2] : memref<2x4x8x32xf32, #tpu.memory_space<vmem>>, vector<2x4x8x32xf32>
    %c0_3 = arith.constant 0 : index
    %c0_4 = arith.constant 0 : index
    %c0_5 = arith.constant 0 : index
    %1 = vector.load %arg1[%c0_3, %c0_4, %c0_5] : memref<4x1x32xf32, #tpu.memory_space<vmem>>, vector<4x1x32xf32>
    %2 = arith.mulf %0, %0 : vector<2x4x8x32xf32>
    %cst = arith.constant dense<0.000000e+00> : vector<2x4x8xf32>
    %3 = vector.multi_reduction <add>, %2, %cst [3] : vector<2x4x8x32xf32> to vector<2x4x8xf32>
    %4 = vector.shape_cast %3 : vector<2x4x8xf32> to vector<2x4x8x1xf32>
    %cst_6 = arith.constant 1.000000e-24 : f32
    %5 = vector.broadcast %cst_6 : f32 to vector<2x4x8x1xf32>
    %6 = arith.maximumf %4, %5 : vector<2x4x8x1xf32>
    %7 = math.rsqrt %6 : vector<2x4x8x1xf32>
    %cst_7 = arith.constant 5.65685415 : f32
    %8 = vector.broadcast %cst_7 : f32 to vector<2x4x8x1xf32>
    %9 = arith.mulf %7, %8 : vector<2x4x8x1xf32>
    %10 = vector.broadcast %9 : vector<2x4x8x1xf32> to vector<2x4x8x32xf32>
    %11 = arith.mulf %0, %10 : vector<2x4x8x32xf32>
    %12 = vector.shape_cast %1 : vector<4x1x32xf32> to vector<1x4x1x32xf32>
    %13 = vector.broadcast %12 : vector<1x4x1x32xf32> to vector<2x4x8x32xf32>
    %14 = arith.mulf %11, %13 : vector<2x4x8x32xf32>
    %c0_8 = arith.constant 0 : index
    %c0_9 = arith.constant 0 : index
    %c0_10 = arith.constant 0 : index
    %c0_11 = arith.constant 0 : index
    %15 = vector.load %arg2[%c0_8, %c0_9, %c0_10, %c0_11] : memref<2x4x8x32xf32, #tpu.memory_space<vmem>>, vector<2x4x8x32xf32>
    tpu.vector_store %arg2[%c0_8, %c0_9, %c0_10, %c0_11], %14 {strides = array<i32>} : memref<2x4x8x32xf32, #tpu.memory_space<vmem>>, vector<2x4x8x32xf32>,
    return
  }
}

</mosaic_0001>

<llo_original>
// kernel: rmsnorm.1
$region0: #{rmsnorm.1}
  #allocation0 [shape = 'u32[]', space=smem, size = 0x4, offset = 0x4, fixed_abs, tag = 'smem constant byte address 0x4 - core index']
  #allocation1 [shape = 'u32[72,128]{1,0:T(1,128)}', space=vmem, size = 0x9000, scoped, tag = 'internal scratch']
  %s0 = inlined_call_operand.hbm [shape: f32[2,4,8,32], index: 0, kind: input, shape index: {}]
  %s1 = inlined_call_operand.hbm [shape: f32[4,1,32], index: 1, kind: input, shape index: {}]
  %s2 = inlined_call_operand.hbm [shape: f32[2,4,8,32], index: 2, kind: output, shape index: {}]
  %s3 = sld [smem:[#allocation0]]
  $region26: #{rmsnorm.1} parent=0
    _
  %s5 = ssub.s32 1, %s3
  %s6 = scalar_select 0, %s5, %s3
  $region1: #{rmsnorm.1} parent=0
    #allocation2 [shape = 'u8[32768]{0}', space=vmem, size = 0x8000, scoped, tag = 'input window, operand 0, single buffered']
    #allocation3 [shape = 's32[1]{0}', space=sflag, size = 0x4, scoped, tag = 'scoped memory for rmsnorm.1']
    #allocation4 [shape = 's32[1]{0}', space=sflag, size = 0x4, scoped, tag = 'scoped memory for rmsnorm.1']
    #allocation5 [shape = 'u8[2048]{0}', space=vmem, size = 0x800, scoped, tag = 'input window, operand 1, single buffered']
    #allocation6 [shape = 's32[1]{0}', space=sflag, size = 0x4, scoped, tag = 'scoped memory for rmsnorm.1']
    #allocation7 [shape = 'u8[32768]{0}', space=vmem, size = 0x8000, scoped, tag = 'output window, operand 0, single buffered']
    %7 = vsyncpa [#allocation3], 0
    %8 = vsyncpa [#allocation6], 0
    %9 = vsyncpa [#allocation4], 0
    // Predicated region
    $region2: #{rmsnorm.1} parent=1 // pred_check
      _
    $region3: #{rmsnorm.1} parent=1 // pred_check_branch
      %11 = sbr.rel (0) target = $region5
    $region4: #{rmsnorm.1} parent=1 // pred_region
      %13 = vsyncadd [#allocation3], 0
      %s14 = sshll.u32 %s0, 4
      %s15 = int_to_ptr.hbm [resolvable:$true] %s14
      %s16 = sshll.u32 [#allocation2], 4
      %s17 = int_to_ptr.vmem [resolvable:$true] %s16
      %22 = dma.hbm_to_vmem [thread:$0]  %s15, 1024, %s17, [#allocation3], 128, 128, 8
    $region5: #{rmsnorm.1} parent=1 // pred_fallthru
      _
    // Predicated region
    $region6: #{rmsnorm.1} parent=1 // pred_check
      _
    $region7: #{rmsnorm.1} parent=1 // pred_check_branch
      %24 = sbr.rel (0) target = $region9
    $region8: #{rmsnorm.1} parent=1 // pred_region
      %26 = vsyncadd [#allocation6], 0
      %s27 = sshll.u32 %s1, 4
      %s28 = int_to_ptr.hbm [resolvable:$true] %s27
      %s29 = sshll.u32 [#allocation5], 4
      %s30 = int_to_ptr.vmem [resolvable:$true] %s29
      %35 = dma.hbm_to_vmem [thread:$0]  %s28, 64, %s30, [#allocation6], 16, 16, 1
    $region9: #{rmsnorm.1} parent=1 // pred_fallthru
      _
    // Predicated region
    $region10: #{rmsnorm.1} parent=1 // pred_check
      _
    $region11: #{rmsnorm.1} parent=1 // pred_check_branch
      %37 = sbr.rel (0) target = $region13
    $region12: #{rmsnorm.1} parent=1 // pred_region
      %39 = dma.done [#allocation3], 1024
    $region13: #{rmsnorm.1} parent=1 // pred_fallthru
      _
    // Predicated region
    $region14: #{rmsnorm.1} parent=1 // pred_check
      _
    $region15: #{rmsnorm.1} parent=1 // pred_check_branch
      %41 = sbr.rel (0) target = $region17
    $region16: #{rmsnorm.1} parent=1 // pred_region
      %43 = dma.done [#allocation6], 64
    $region17: #{rmsnorm.1} parent=1 // pred_fallthru
      _
    %v44 = vld [vmem:[#allocation2] sm:$0xff]
    %v45 = vld [vmem:[#allocation2 + $0x8] sm:$0xff]
    %v46 = vld [vmem:[#allocation2 + $0x10] sm:$0xff]
    %v47 = vld [vmem:[#allocation2 + $0x18] sm:$0xff]
    %v48 = vld [vmem:[#allocation2 + $0x20] sm:$0xff]
    %v49 = vld [vmem:[#allocation2 + $0x28] sm:$0xff]
    %v50 = vld [vmem:[#allocation2 + $0x30] sm:$0xff]
    %v51 = vld [vmem:[#allocation2 + $0x38] sm:$0xff]
    %v52 = vld [vmem:[#allocation5] sm:$0x1]
    %v53 = vld [vmem:[#allocation5 + $0x1] sm:$0x1]
    %v54 = vld [vmem:[#allocation5 + $0x2] sm:$0x1]
    %v55 = vld [vmem:[#allocation5 + $0x3] sm:$0x1]
    %v56 = vmul.f32 %v44, %v44
    %v57 = vmul.f32 %v45, %v45
    %v58 = vmul.f32 %v46, %v46
    %v59 = vmul.f32 %v47, %v47
    %v60 = vmul.f32 %v48, %v48
    %v61 = vmul.f32 %v49, %v49
    %v62 = vmul.f32 %v50, %v50
    %v63 = vmul.f32 %v51, %v51
    %vm64 = vcmask 261120
    %v65 = vsel %vm64, %v56, 0.0
    %66 = vadd.xlane.f32.xlu0 %v65
    %v67 = vpop.xlane.xlu0 %66
    %v68 = vsel %vm64, %v57, 0.0
    %69 = vadd.xlane.f32.xlu0 %v68
    %v70 = vpop.xlane.xlu0 %69
    %v71 = vsel %vm64, %v58, 0.0
    %72 = vadd.xlane.f32.xlu0 %v71
    %v73 = vpop.xlane.xlu0 %72
    %v74 = vsel %vm64, %v59, 0.0
    %75 = vadd.xlane.f32.xlu0 %v74
    %v76 = vpop.xlane.xlu0 %75
    %v77 = vsel %vm64, %v60, 0.0
    %78 = vadd.xlane.f32.xlu0 %v77
    %v79 = vpop.xlane.xlu0 %78
    %v80 = vsel %vm64, %v61, 0.0
    %81 = vadd.xlane.f32.xlu0 %v80
    %v82 = vpop.xlane.xlu0 %81
    %v83 = vsel %vm64, %v62, 0.0
    %84 = vadd.xlane.f32.xlu0 %v83
    %v85 = vpop.xlane.xlu0 %84
    %v86 = vsel %vm64, %v63, 0.0
    %87 = vadd.xlane.f32.xlu0 %v86
    %v88 = vpop.xlane.xlu0 %87
    %v89 = vmax.f32 %v67, 1e-24
    %v90 = vmax.f32 %v70, 1e-24
    %v91 = vmax.f32 %v73, 1e-24
    %v92 = vmax.f32 %v76, 1e-24
    %v93 = vmax.f32 %v79, 1e-24
    %v94 = vmax.f32 %v82, 1e-24
    %v95 = vmax.f32 %v85, 1e-24
    %v96 = vmax.f32 %v88, 1e-24
    %v97 = vrsqrt.pop %v89
    %v98 = vmul.f32 %v97, %v89
    %v99 = vmul.f32 %v98, %v97
    %v100 = vmul.f32 0.5, %v99
    %v101 = vsub.f32 1.5, %v100
    %v102 = vmul.f32 %v97, %v101
    %vm103 = vweird.f32 %v89
    %vm104 = vweird.f32 %v97
    %vm105 = vmor %vm103, %vm104
    %v106 = vsel %vm105, %v97, %v102
    %v107 = vrsqrt.pop %v90
    %v108 = vmul.f32 %v107, %v90
    %v109 = vmul.f32 %v108, %v107
    %v110 = vmul.f32 0.5, %v109
    %v111 = vsub.f32 1.5, %v110
    %v112 = vmul.f32 %v107, %v111
    %vm113 = vweird.f32 %v90
    %vm114 = vweird.f32 %v107
    %vm115 = vmor %vm113, %vm114
    %v116 = vsel %vm115, %v107, %v112
    %v117 = vrsqrt.pop %v91
    %v118 = vmul.f32 %v117, %v91
    %v119 = vmul.f32 %v118, %v117
    %v120 = vmul.f32 0.5, %v119
    %v121 = vsub.f32 1.5, %v120
    %v122 = vmul.f32 %v117, %v121
    %vm123 = vweird.f32 %v91
    %vm124 = vweird.f32 %v117
    %vm125 = vmor %vm123, %vm124
    %v126 = vsel %vm125, %v117, %v122
    %v127 = vrsqrt.pop %v92
    %v128 = vmul.f32 %v127, %v92
    %v129 = vmul.f32 %v128, %v127
    %v130 = vmul.f32 0.5, %v129
    %v131 = vsub.f32 1.5, %v130
    %v132 = vmul.f32 %v127, %v131
    %vm133 = vweird.f32 %v92
    %vm134 = vweird.f32 %v127
    %vm135 = vmor %vm133, %vm134
    %v136 = vsel %vm135, %v127, %v132
    %v137 = vrsqrt.pop %v93
    %v138 = vmul.f32 %v137, %v93
    %v139 = vmul.f32 %v138, %v137
    %v140 = vmul.f32 0.5, %v139
    %v141 = vsub.f32 1.5, %v140
    %v142 = vmul.f32 %v137, %v141
    %vm143 = vweird.f32 %v93
    %vm144 = vweird.f32 %v137
    %vm145 = vmor %vm143, %vm144
    %v146 = vsel %vm145, %v137, %v142
    %v147 = vrsqrt.pop %v94
    %v148 = vmul.f32 %v147, %v94
    %v149 = vmul.f32 %v148, %v147
    %v150 = vmul.f32 0.5, %v149
    %v151 = vsub.f32 1.5, %v150
    %v152 = vmul.f32 %v147, %v151
    %vm153 = vweird.f32 %v94
    %vm154 = vweird.f32 %v147
    %vm155 = vmor %vm153, %vm154
    %v156 = vsel %vm155, %v147, %v152
    %v157 = vrsqrt.pop %v95
    %v158 = vmul.f32 %v157, %v95
    %v159 = vmul.f32 %v158, %v157
    %v160 = vmul.f32 0.5, %v159
    %v161 = vsub.f32 1.5, %v160
    %v162 = vmul.f32 %v157, %v161
    %vm163 = vweird.f32 %v95
    %vm164 = vweird.f32 %v157
    %vm165 = vmor %vm163, %vm164
    %v166 = vsel %vm165, %v157, %v162
    %v167 = vrsqrt.pop %v96
    %v168 = vmul.f32 %v167, %v96
    %v169 = vmul.f32 %v168, %v167
    %v170 = vmul.f32 0.5, %v169
    %v171 = vsub.f32 1.5, %v170
    %v172 = vmul.f32 %v167, %v171
    %vm173 = vweird.f32 %v96
    %vm174 = vweird.f32 %v167
    %vm175 = vmor %vm173, %vm174
    %v176 = vsel %vm175, %v167, %v172
    %v177 = vmul.f32 %v106, 5.656854
    %v178 = vmul.f32 %v116, 5.656854
    %v179 = vmul.f32 %v126, 5.656854
    %v180 = vmul.f32 %v136, 5.656854
    %v181 = vmul.f32 %v146, 5.656854
    %v182 = vmul.f32 %v156, 5.656854
    %v183 = vmul.f32 %v166, 5.656854
    %v184 = vmul.f32 %v176, 5.656854
    %v185 = vmul.f32 %v44, %v177
    %v186 = vmul.f32 %v45, %v178
    %v187 = vmul.f32 %v46, %v179
    %v188 = vmul.f32 %v47, %v180
    %v189 = vmul.f32 %v48, %v181
    %v190 = vmul.f32 %v49, %v182
    %v191 = vmul.f32 %v50, %v183
    %v192 = vmul.f32 %v51, %v184
    %v197 = vperm.slane %v52, 0
    %v198 = vperm.slane %v53, 0
    %v199 = vperm.slane %v54, 0
    %v200 = vperm.slane %v55, 0
    %v205 = vmul.f32 %v185, %v197
    %v206 = vmul.f32 %v186, %v198
    %v207 = vmul.f32 %v187, %v199
    %v208 = vmul.f32 %v188, %v200
    %v209 = vmul.f32 %v189, %v197
    %v210 = vmul.f32 %v190, %v198
    %v211 = vmul.f32 %v191, %v199
    %v212 = vmul.f32 %v192, %v200
    %213 = vst.msk [vmem:[#allocation7] sm:$0xff] %vm64, %v205
    %214 = vst.msk [vmem:[#allocation7 + $0x8] sm:$0xff] %vm64, %v206
    %215 = vst.msk [vmem:[#allocation7 + $0x10] sm:$0xff] %vm64, %v207
    %216 = vst.msk [vmem:[#allocation7 + $0x18] sm:$0xff] %vm64, %v208
    %217 = vst.msk [vmem:[#allocation7 + $0x20] sm:$0xff] %vm64, %v209
    %218 = vst.msk [vmem:[#allocation7 + $0x28] sm:$0xff] %vm64, %v210
    %219 = vst.msk [vmem:[#allocation7 + $0x30] sm:$0xff] %vm64, %v211
    %220 = vst.msk [vmem:[#allocation7 + $0x38] sm:$0xff] %vm64, %v212
    // Predicated region
    $region18: #{rmsnorm.1} parent=1 // pred_check
      _
    $region19: #{rmsnorm.1} parent=1 // pred_check_branch
      %222 = sbr.rel (0) target = $region21
    $region20: #{rmsnorm.1} parent=1 // pred_region
      %224 = vsyncadd [#allocation4], 0
      %s225 = sshll.u32 [#allocation7], 4
      %s226 = int_to_ptr.vmem [resolvable:$true] %s225
      %s227 = sshll.u32 %s2, 4
      %s228 = int_to_ptr.hbm [resolvable:$true] %s227
      %233 = dma.vmem_to_hbm [thread:$0]  %s226, 1024, %s228, [#allocation4], 128, 128, 8
    $region21: #{rmsnorm.1} parent=1 // pred_fallthru
      _
    // Predicated region
    $region22: #{rmsnorm.1} parent=1 // pred_check
      _
    $region23: #{rmsnorm.1} parent=1 // pred_check_branch
      %235 = sbr.rel (0) target = $region25
    $region24: #{rmsnorm.1} parent=1 // pred_region
      %237 = dma.done [#allocation4], 1024
    $region25: #{rmsnorm.1} parent=1 // pred_fallthru
      _
    %238 = vsyncpa [#allocation3], 1
    %239 = vsyncpa [#allocation6], 1
    %240 = vsyncpa [#allocation4], 1

</llo_original>
